<compile_context>
chip_gen: v7x
topology: tpu7x:2x2x1
jax: 0.10.0
libtpu: 0.0.40
codegen_flags: <defaults>
</compile_context>

<pallas_src>
import jax
import jax.numpy as jnp
from jax import lax
from jax.experimental import pallas as pl
from jax.experimental.pallas import tpu as pltpu


_N_TEMPS = 6                      # ~ live block-sized f32 temporaries in the tiled body
_SMALL_PLANE_BYTES = 8 * 1024 * 1024
_FLAT_PAD = 128                   # lane-aligned zero border of the flattened slab
_R0 = 8                           # sublane-aligned slab row of the main tile


def _vmem_budgets():
    """(working-set target, scoped-VMEM limit) in bytes, generation aware."""
    try:
        cap = int(pltpu.get_tpu_info().vmem_capacity_bytes)
    except Exception:
        cap = None
    if cap is not None and cap >= 96 * 1024 * 1024:
        # v5e / v6e: 128 MiB of VMEM -> big row tiles (kernel is HBM-bound there).
        return 56 * 1024 * 1024, 100 * 1024 * 1024
    # v7x (64 MiB per TensorCore) or unknown: stay conservative.
    return 20 * 1024 * 1024, 48 * 1024 * 1024


def _choose_row_block(C, c_out, H, W, budget_bytes):
    """Largest row tile whose working set fits the budget (lane padding included)."""
    Wp = ((W + 127) // 128) * 128
    # per output row (f32 bytes): double-buffered input + output blocks, one slab
    # row, and ~_N_TEMPS block-sized elementwise temporaries (A/B/rolled taps/gx/gy).
    per_row = 4 * Wp * (2 * C + 2 * c_out + C + _N_TEMPS * C)
    # fixed: two 1-row halo blocks (x2 buffers, padded to 8 sublanes) + 16 slab rows.
    fixed = 4 * Wp * C * (2 * 2 * 8 + 16)
    avail = max(budget_bytes - fixed, per_row)
    th = avail // per_row
    if th >= H:
        return H
    return min(max(8, (th // 8) * 8), H)


# ----------------------------------------------------------------------------
# Row-tiled path: all C channels per step, 1-row halos, in-VMEM zero padding.
# ----------------------------------------------------------------------------
def _make_tiled_kernel(C, H, W, TH, as_gray):
    rem = H % TH

    def kernel(x_ref, top_ref, bot_ref, o_ref, xe_ref):
        # x_ref:   (1, C, TH, W)   rows [h*TH, h*TH + TH)
        # top_ref: (1, C, 1, W)    image row h*TH - 1   (clamped; zeroed at h == 0)
        # bot_ref: (1, C, 1, W)    image row (h+1)*TH   (clamped; zeroed at bottom)
        # o_ref:   (1, c_out, TH, W)
        # xe_ref:  (C, TH+16, W)   slab: main tile at rows [_R0, _R0+TH), halos at
        #                          rows _R0-1 and _R0+TH; no column padding.
        h = pl.program_id(1)

        x = x_ref[0]                                  # (C, TH, W)
        xe_ref[:, _R0:_R0 + TH, :] = x                # aligned, unmasked full-tile store

        if rem != 0:
            @pl.when(h == pl.num_programs(1) - 1)
            def _():
                # Partial last tile: zero only the static tail rows so that the
                # r+1 neighbour of the last valid image row is the zero padding.
                xe_ref[:, _R0 + rem:_R0 + TH, :] = jnp.zeros(
                    (C, TH - rem, W), jnp.float32)

        # 1-row halos (zero padding at the image top/bottom).
        @pl.when(h > 0)
        def _():
            xe_ref[:, _R0 - 1:_R0, :] = top_ref[0]

        @pl.when(h == 0)
        def _():
            xe_ref[:, _R0 - 1:_R0, :] = jnp.zeros((C, 1, W), jnp.float32)

        @pl.when((h + 1) * TH < H)
        def _():
            xe_ref[:, _R0 + TH:_R0 + TH + 1, :] = bot_ref[0]

        @pl.when((h + 1) * TH >= H)
        def _():
            xe_ref[:, _R0 + TH:_R0 + TH + 1, :] = jnp.zeros((C, 1, W), jnp.float32)

        # Vertical taps straight from the slab (row shift folded into the loads,
        # no sublane slices of materialised values).
        x_up = xe_ref[:, _R0 - 1:_R0 - 1 + TH, :]     # x[r-1, c]
        x_dn = xe_ref[:, _R0 + 1:_R0 + 1 + TH, :]     # x[r+1, c]

        a = (x_up + x_dn) + 2.0 * x                   # vertical smooth -> gx columns
        b = x_up - x_dn                               # vertical diff   -> gy columns

        # Horizontal +/-1 shifts on the XLU; wrapped lanes are masked to zero
        # (left/right image borders).  shift W-1 == logical shift -1.
        col = lax.broadcasted_iota(jnp.int32, (C, TH, W), 2)
        not_first = col != 0
        not_last = col != (W - 1)
        a_l = jnp.where(not_first, pltpu.roll(a, 1, 2), 0.0)      # a[c-1]
        a_r = jnp.where(not_last, pltpu.roll(a, W - 1, 2), 0.0)   # a[c+1]
        b_l = jnp.where(not_first, pltpu.roll(b, 1, 2), 0.0)
        b_r = jnp.where(not_last, pltpu.roll(b, W - 1, 2), 0.0)

        gx = a_l - a_r
        gy = b_l + 2.0 * b + b_r
        # PyTorch: sqrt(clamp(gx**2 + gy**2, min=1e-8))
        edge = jnp.sqrt(jnp.maximum(gx * gx + gy * gy, 1e-8))

        if as_gray:
            o_ref[0] = jnp.mean(edge, axis=0, keepdims=True)
        else:
            o_ref[0] = edge

    return kernel


def _sobel_tiled(x, as_gray, row_block, budget, limit):
    N, C, H, W = x.shape
    c_out = 1 if as_gray else C
    if row_block is None:
        TH = _choose_row_block(C, c_out, H, W, budget)
    else:
        TH = min(max(8, ((int(row_block) + 7) // 8) * 8), H)
    nH = (H + TH - 1) // TH

    # NOTE: the halo row-block size is 1, so the *block* index returned by the
    # index_map coincides with the element row index.  Do not change the block
    # size in that dim without also changing the index math.
    top_spec = pl.BlockSpec(
        (1, C, 1, W), lambda n, h: (n, 0, jnp.maximum(h * TH - 1, 0), 0))
    bot_spec = pl.BlockSpec(
        (1, C, 1, W), lambda n, h: (n, 0, jnp.minimum((h + 1) * TH, H - 1), 0))

    return pl.pallas_call(
        _make_tiled_kernel(C, H, W, TH, as_gray),
        out_shape=jax.ShapeDtypeStruct((N, c_out, H, W), jnp.float32),
        grid_spec=pltpu.PrefetchScalarGridSpec(
            num_scalar_prefetch=0,
            grid=(N, nH),
            in_specs=[
                pl.BlockSpec((1, C, TH, W), lambda n, h: (n, 0, h, 0)),
                top_spec,
                bot_spec,
            ],
            out_specs=pl.BlockSpec((1, c_out, TH, W), lambda n, h: (n, 0, h, 0)),
            scratch_shapes=[pltpu.VMEM((C, TH + 16, W), jnp.float32)],
        ),
        compiler_params=pltpu.CompilerParams(
            dimension_semantics=("parallel", "parallel"),
            vmem_limit_bytes=int(limit)),
    )(x, x, x)


# ----------------------------------------------------------------------------
# Small-W path: lane-dense flattened (N, C, H*W) layout, whole plane per step.
# ----------------------------------------------------------------------------
def _make_flat_kernel(Cb, H, W, as_gray):
    HW = H * W
    PAD = _FLAT_PAD
    L = HW + 2 * PAD

    def kernel(mask_ref, x_ref, o_ref, xe_ref):
        # mask_ref: (2, HW)  row 0: 0.0 on first columns, row 1: 0.0 on last columns
        # x_ref:    (1, Cb, HW)     o_ref: (1, cb_out, HW)     xe_ref: (Cb, L)
        xe_ref[:, 0:PAD] = jnp.zeros((Cb, PAD), jnp.float32)
        xe_ref[:, PAD + HW:L] = jnp.zeros((Cb, PAD), jnp.float32)
        x = x_ref[0]
        xe_ref[:, PAD:PAD + HW] = x                   # lane-aligned full store

        up = xe_ref[:, PAD - W:PAD - W + HW]          # x[r-1, c]  (zero at row 0)
        dn = xe_ref[:, PAD + W:PAD + W + HW]          # x[r+1, c]  (zero at row H-1)

        a = (up + dn) + 2.0 * x
        b = up - dn

        ml = jnp.broadcast_to(mask_ref[0:1, :], (Cb, HW))
        mr = jnp.broadcast_to(mask_ref[1:2, :], (Cb, HW))
        a_l = pltpu.roll(a, 1, 1) * ml                # a[c-1], zeroed on first cols
        a_r = pltpu.roll(a, HW - 1, 1) * mr           # a[c+1], zeroed on last cols
        b_l = pltpu.roll(b, 1, 1) * ml
        b_r = pltpu.roll(b, HW - 1, 1) * mr

        gx = a_l - a_r
        gy = b_l + 2.0 * b + b_r
        edge = jnp.sqrt(jnp.maximum(gx * gx + gy * gy, 1e-8))

        if as_gray:
            o_ref[0] = jnp.mean(edge, axis=0, keepdims=True)
        else:
            o_ref[0] = edge

    return kernel


def _sobel_flat(x, as_gray, limit):
    N, C, H, W = x.shape
    HW = H * W
    c_out = 1 if as_gray else C
    # All channels per step (needed for the fused grayscale mean); for N == 1
    # multi-channel non-gray inputs use a per-channel grid axis so both v7x
    # TensorCores get work.
    Cb = C if (as_gray or N >= 2 or C == 1) else 1
    cb_out = 1 if as_gray else Cb
    nC = C // Cb

    col = jnp.arange(HW, dtype=jnp.int32) % W
    mask = jnp.stack([jnp.where(col != 0, 1.0, 0.0),
                      jnp.where(col != W - 1, 1.0, 0.0)]).astype(jnp.float32)

    xf = x.reshape(N, C, HW)                           # free reshape, no HBM pass
    out = pl.pallas_call(
        _make_flat_kernel(Cb, H, W, as_gray),
        out_shape=jax.ShapeDtypeStruct((N, c_out, HW), jnp.float32),
        grid_spec=pltpu.PrefetchScalarGridSpec(
            num_scalar_prefetch=0,
            grid=(N, nC),
            in_specs=[
                pl.BlockSpec((2, HW), lambda n, c: (0, 0)),
                pl.BlockSpec((1, Cb, HW), lambda n, c: (n, c, 0)),
            ],
            out_specs=pl.BlockSpec((1, cb_out, HW), lambda n, c: (n, c, 0)),
            scratch_shapes=[pltpu.VMEM((Cb, HW + 2 * _FLAT_PAD), jnp.float32)],
        ),
        compiler_params=pltpu.CompilerParams(
            dimension_semantics=("parallel", "parallel"),
            vmem_limit_bytes=int(limit)),
    )(mask, xf)
    return out.reshape(N, c_out, H, W)


# ----------------------------------------------------------------------------
# Public entry point.
# ----------------------------------------------------------------------------
def sobel_filter(x, as_grayscale=False, row_block=None):
    """Sobel edge magnitude matching PyTorch `SobelFilter.forward`.

    x: (N, C, H, W). Returns (N, C, H, W), or (N, 1, H, W) when
    as_grayscale=True (channel mean fused into the kernel).
    """
    N, C, H, W = x.shape
    x = x.astype(jnp.float32)
    c_out = 1 if as_grayscale else C
    budget, limit = _vmem_budgets()

    HW = H * W
    flat_ws = 4 * HW * ((_N_TEMPS + 3) * C + 2 * c_out) + 4 * C * (HW + 2 * _FLAT_PAD)
    if row_block is None and W < 128 and flat_ws <= _SMALL_PLANE_BYTES:
        return _sobel_flat(x, as_grayscale, limit)
    return _sobel_tiled(x, as_grayscale, row_block, budget, limit)


def _sobel_reference(x, as_grayscale=False):
    # Pure-JAX reference (same math as PyTorch conv2d cross-correlation).
    N, C, H, W = x.shape
    xp = jnp.pad(x.astype(jnp.float32), ((0, 0), (0, 0), (1, 1), (1, 1)))

    def win(di, dj):
        return xp[:, :, di:di + H, dj:dj + W]

    gx = (win(0, 0) - win(0, 2)) + 2.0 * (win(1, 0) - win(1, 2)) \
        + (win(2, 0) - win(2, 2))
    gy = (win(0, 0) + 2.0 * win(0, 1) + win(0, 2)) \
        - (win(2, 0) + 2.0 * win(2, 1) + win(2, 2))
    edge = jnp.sqrt(jnp.maximum(gx * gx + gy * gy, 1e-8))
    if as_grayscale:
        edge = jnp.mean(edge, axis=1, keepdims=True)
    return edge


if __name__ == "__main__":
    key = jax.random.PRNGKey(0)
    k1, k2, k3 = jax.random.split(key, 3)

    # 1) Small-W flattened, lane-dense path (batch=2, channels=4, 16x16).
    x1 = jax.random.normal(k1, (2, 4, 16, 16), dtype=jnp.float32)
    out1 = jax.block_until_ready(sobel_filter(x1))
    assert out1.shape == (2, 4, 16, 16)
    assert jnp.allclose(out1, _sobel_reference(x1), atol=1e-5, rtol=1e-5)

    out1g = jax.block_until_ready(sobel_filter(x1, as_grayscale=True))
    assert out1g.shape == (2, 1, 16, 16)
    assert jnp.allclose(out1g, _sobel_reference(x1, as_grayscale=True),
                        atol=1e-5, rtol=1e-5)

    # 2) Flat path with N == 1: per-channel grid axis (megacore sharding on v7x).
    x2 = jax.random.normal(k2, (1, 4, 16, 16), dtype=jnp.float32)
    out2 = jax.block_until_ready(sobel_filter(x2))
    assert jnp.allclose(out2, _sobel_reference(x2), atol=1e-5, rtol=1e-5)

    # 3) Row-tiled halo path with a partial last tile (20 % 8 != 0).
    x3 = jax.random.normal(k3, (2, 3, 20, 256), dtype=jnp.float32)
    out3 = jax.block_until_ready(sobel_filter(x3, row_block=8))
    assert jnp.allclose(out3, _sobel_reference(x3), atol=1e-5, rtol=1e-5)

    out3g = jax.block_until_ready(sobel_filter(x3, as_grayscale=True, row_block=8))
    assert jnp.allclose(out3g, _sobel_reference(x3, as_grayscale=True),
                        atol=1e-5, rtol=1e-5)

    print("KERNEL_OK")
</pallas_src>

<mosaic_0001>
module attributes {stable_mosaic.version = 11 : i64} {
  func.func @kernel(%arg0: i32, %arg1: i32, %arg2: memref<2x256xf32, #tpu.memory_space<vmem>>, %arg3: memref<1x4x256xf32, #tpu.memory_space<vmem>>, %arg4: memref<1x4x256xf32, #tpu.memory_space<vmem>>, %arg5: memref<4x512xf32, #tpu.memory_space<vmem>>) attributes {dimension_semantics = [#tpu.dimension_semantics<parallel>, #tpu.dimension_semantics<parallel>], iteration_bounds = array<i64: 2, 1>, scalar_prefetch = 0 : i64, scratch_operands = 1 : i64, tpu.core_type = #tpu.core_type<tc>, window_params = [{pipeline_mode = #tpu.pipeline_mode<synchronous>, transform_indices = @transform_0, window_bounds = array<i64: 2, 256>}, {transform_indices = @transform_1, window_bounds = array<i64: 1, 4, 256>}, {transform_indices = @transform_2, window_bounds = array<i64: 1, 4, 256>}]} {
    %cst = arith.constant 0.000000e+00 : f32
    %0 = vector.broadcast %cst : f32 to vector<4x128xf32>
    %c0 = arith.constant 0 : index
    %c0_0 = arith.constant 0 : index
    %1 = vector.load %arg5[%c0, %c0_0] : memref<4x512xf32, #tpu.memory_space<vmem>>, vector<4x128xf32>
    tpu.vector_store %arg5[%c0, %c0_0], %0 {strides = array<i32>} : memref<4x512xf32, #tpu.memory_space<vmem>>, vector<4x128xf32>,
    %cst_1 = arith.constant 0.000000e+00 : f32
    %2 = vector.broadcast %cst_1 : f32 to vector<4x128xf32>
    %c0_2 = arith.constant 0 : index
    %c384 = arith.constant 384 : index
    %3 = vector.load %arg5[%c0_2, %c384] : memref<4x512xf32, #tpu.memory_space<vmem>>, vector<4x128xf32>
    tpu.vector_store %arg5[%c0_2, %c384], %2 {strides = array<i32>} : memref<4x512xf32, #tpu.memory_space<vmem>>, vector<4x128xf32>,
    %c0_3 = arith.constant 0 : index
    %c0_4 = arith.constant 0 : index
    %c0_5 = arith.constant 0 : index
    %4 = vector.load %arg3[%c0_3, %c0_4, %c0_5] : memref<1x4x256xf32, #tpu.memory_space<vmem>>, vector<1x4x256xf32>
    %5 = vector.shape_cast %4 : vector<1x4x256xf32> to vector<4x256xf32>
    %c0_6 = arith.constant 0 : index
    %c128 = arith.constant 128 : index
    %6 = vector.load %arg5[%c0_6, %c128] : memref<4x512xf32, #tpu.memory_space<vmem>>, vector<4x256xf32>
    tpu.vector_store %arg5[%c0_6, %c128], %5 {strides = array<i32>} : memref<4x512xf32, #tpu.memory_space<vmem>>, vector<4x256xf32>,
    %c0_7 = arith.constant 0 : index
    %c112 = arith.constant 112 : index
    %7 = vector.load %arg5[%c0_7, %c112] : memref<4x512xf32, #tpu.memory_space<vmem>>, vector<4x256xf32>
    %c0_8 = arith.constant 0 : index
    %c144 = arith.constant 144 : index
    %8 = vector.load %arg5[%c0_8, %c144] : memref<4x512xf32, #tpu.memory_space<vmem>>, vector<4x256xf32>
    %9 = arith.addf %7, %8 : vector<4x256xf32>
    %cst_9 = arith.constant 2.000000e+00 : f32
    %10 = vector.broadcast %cst_9 : f32 to vector<4x256xf32>
    %11 = arith.mulf %10, %5 : vector<4x256xf32>
    %12 = arith.addf %9, %11 : vector<4x256xf32>
    %13 = arith.subf %7, %8 : vector<4x256xf32>
    %c0_10 = arith.constant 0 : index
    %c0_11 = arith.constant 0 : index
    %14 = vector.load %arg2[%c0_10, %c0_11] : memref<2x256xf32, #tpu.memory_space<vmem>>, vector<1x256xf32>
    %15 = vector.shape_cast %14 : vector<1x256xf32> to vector<1x256xf32>
    %16 = vector.broadcast %15 : vector<1x256xf32> to vector<4x256xf32>
    %c1 = arith.constant 1 : index
    %c0_12 = arith.constant 0 : index
    %17 = vector.load %arg2[%c1, %c0_12] : memref<2x256xf32, #tpu.memory_space<vmem>>, vector<1x256xf32>
    %18 = vector.shape_cast %17 : vector<1x256xf32> to vector<1x256xf32>
    %19 = vector.broadcast %18 : vector<1x256xf32> to vector<4x256xf32>
    %c1_i32 = arith.constant 1 : i32
    %20 = tpu.dynamic_rotate %12 by %c1_i32 dim 1 : vector<4x256xf32>, i32 -> vector<4x256xf32>
    %21 = arith.mulf %20, %16 : vector<4x256xf32>
    %c255_i32 = arith.constant 255 : i32
    %22 = tpu.dynamic_rotate %12 by %c255_i32 dim 1 : vector<4x256xf32>, i32 -> vector<4x256xf32>
    %23 = arith.mulf %22, %19 : vector<4x256xf32>
    %c1_i32_13 = arith.constant 1 : i32
    %24 = tpu.dynamic_rotate %13 by %c1_i32_13 dim 1 : vector<4x256xf32>, i32 -> vector<4x256xf32>
    %25 = arith.mulf %24, %16 : vector<4x256xf32>
    %c255_i32_14 = arith.constant 255 : i32
    %26 = tpu.dynamic_rotate %13 by %c255_i32_14 dim 1 : vector<4x256xf32>, i32 -> vector<4x256xf32>
    %27 = arith.mulf %26, %19 : vector<4x256xf32>
    %28 = arith.subf %21, %23 : vector<4x256xf32>
    %cst_15 = arith.constant 2.000000e+00 : f32
    %29 = vector.broadcast %cst_15 : f32 to vector<4x256xf32>
    %30 = arith.mulf %29, %13 : vector<4x256xf32>
    %31 = arith.addf %25, %30 : vector<4x256xf32>
    %32 = arith.addf %31, %27 : vector<4x256xf32>
    %33 = arith.mulf %28, %28 : vector<4x256xf32>
    %34 = arith.mulf %32, %32 : vector<4x256xf32>
    %35 = arith.addf %33, %34 : vector<4x256xf32>
    %cst_16 = arith.constant 9.99999993E-9 : f32
    %36 = vector.broadcast %cst_16 : f32 to vector<4x256xf32>
    %37 = arith.maximumf %35, %36 : vector<4x256xf32>
    %38 = math.sqrt %37 : vector<4x256xf32>
    %c0_17 = arith.constant 0 : index
    %c0_18 = arith.constant 0 : index
    %c0_19 = arith.constant 0 : index
    %39 = vector.load %arg4[%c0_17, %c0_18, %c0_19] : memref<1x4x256xf32, #tpu.memory_space<vmem>>, vector<1x4x256xf32>
    %40 = vector.shape_cast %39 : vector<1x4x256xf32> to vector<4x256xf32>
    %41 = vector.shape_cast %38 : vector<4x256xf32> to vector<1x4x256xf32>
    tpu.vector_store %arg4[%c0_17, %c0_18, %c0_19], %41 {strides = array<i32>} : memref<1x4x256xf32, #tpu.memory_space<vmem>>, vector<1x4x256xf32>,
    return
  }
  func.func @transform_0(%arg0: i32, %arg1: i32) -> (i32, i32) {
    %c0_i32 = arith.constant 0 : i32
    %c0_i32_0 = arith.constant 0 : i32
    %c0_i32_1 = arith.constant 0 : i32
    return %c0_i32, %c0_i32_0 : i32, i32
  }
  func.func @transform_1(%arg0: i32, %arg1: i32) -> (i32, i32, i32) {
    %c0_i32 = arith.constant 0 : i32
    %c0_i32_0 = arith.constant 0 : i32
    return %arg0, %arg1, %c0_i32 : i32, i32, i32
  }
  func.func @transform_2(%arg0: i32, %arg1: i32) -> (i32, i32, i32) {
    %c0_i32 = arith.constant 0 : i32
    %c0_i32_0 = arith.constant 0 : i32
    return %arg0, %arg1, %c0_i32 : i32, i32, i32
  }
}

</mosaic_0001>

<llo_original>
// kernel: tpu_custom_call.1
$region0: #{tpu_custom_call.1}
  #allocation0 [shape = 'u32[]', space=smem, size = 0x4, offset = 0x4, fixed_abs, tag = 'smem constant byte address 0x4 - core index']
  #allocation1 [shape = 'u32[144,128]{1,0:T(1,128)}', space=vmem, size = 0x12000, scoped, tag = 'internal scratch']
  #allocation2 [shape = 'f32[4,512]{1,0:T(4,128)}', space=vmem, size = 0x2000, scoped, tag = 'scratch operand']
  %s0 = inlined_call_operand.hbm [shape: f32[2,256], index: 0, kind: input, shape index: {}]
  %s1 = inlined_call_operand.hbm [shape: f32[2,4,256], index: 1, kind: input, shape index: {}]
  %s2 = inlined_call_operand.hbm [shape: f32[2,4,256], index: 2, kind: output, shape index: {}]
  %s3 = sld [smem:[#allocation0]]
  $region49: #{tpu_custom_call.1} parent=0
    _
  %s5 = ssub.s32 1, %s3
  %s6 = scalar_select 0, %s5, %s3
  $region1: #{tpu_custom_call.1} parent=0
    #allocation3 [shape = 'u8[2048]{0}', space=vmem, size = 0x800, scoped, tag = 'input window, operand 0, single buffered']
    #allocation4 [shape = 's32[2]{0}', space=sflag, size = 0x8, scoped, tag = 'scoped memory for tpu_custom_call.1']
    #allocation5 [shape = 's32[2]{0}', space=sflag, size = 0x8, scoped, tag = 'scoped memory for tpu_custom_call.1']
    #allocation6 [shape = 'u8[8192]{0}', space=vmem, size = 0x2000, scoped, tag = 'input window, operand 1']
    #allocation7 [shape = 's32[2]{0}', space=sflag, size = 0x8, scoped, tag = 'scoped memory for tpu_custom_call.1']
    #allocation8 [shape = 'u8[8192]{0}', space=vmem, size = 0x2000, scoped, tag = 'output window, operand 0']
    %7 = vsyncpa [#allocation4], 0
    %8 = vsyncpa [#allocation7], 0
    %s9 = scalar_lea.sflag [#allocation7], 1
    %10 = vsyncpa %s9, 0
    %11 = vsyncpa [#allocation5], 0
    %s12 = scalar_lea.sflag [#allocation5], 1
    %13 = vsyncpa %s12, 0
    loop: start=0, step=1, limit=4
    $region2: #{tpu_custom_call.1} parent=1 // loop_pre_header
      _
    $region3: #{tpu_custom_call.1} parent=1 // loop_header
      %s15 = sphi 0, %s19
      %p16 = scmp.ge.s32.totalorder %s15, 4
      %s22 = sphi 0, %s34
      %s23 = sphi 0, %s30
      %s24 = sphi 0, %s22
      %s25 = sphi 0, %s23
      %s26 = sphi 0, %s24
      %s27 = sphi 0, %s25
      %s35 = sphi 0, %s35
      %s37 = sphi 0, %s35
      %s38 = sphi 0, %s37
      %s52 = sphi 0, %s38
      %s60 = sphi 0, %s62
      %s63 = sphi 0, %s60
      %s64 = sphi 0, %s63
      %s80 = sphi 0, %s64
      %s88 = sphi 0, %s90
      %s91 = sphi 0, %s88
      %s92 = sphi 0, %s91
      %s108 = sphi 0, %s92
    $region4: #{tpu_custom_call.1} parent=1 // loop_header_branch
      %18 = sbr.rel (%p16) target = $region8
    $region5: #{tpu_custom_call.1} parent=1 // loop_body
      %s20 = ssub.s32 %s15, 1
      %s21 = ssub.s32 %s15, 2
      %s28 = sadd.s32 1, %s23
      %p29 = scmp.ge.s32.totalorder %s28, 1
      %s30 = scalar_select %p29, 0, %s28
      %s31 = sadd.s32 1, %s22
      %s32 = scalar_select %p29, %s31, %s22
      %p33 = scmp.ge.s32.totalorder %s32, 2
      %s34 = scalar_select %p33, 0, %s32
      %s36 = sadd.s32 %s35, 1
      %p39 = scmp.eq.s32.totalorder %s15, 1
      %p40 = scmp.ne.s32.totalorder %s35, %s37
      %p41 = scmp.eq.s32.totalorder %s15, 0
      %p42 = por %p40, %p41
      %p43 = scmp.ne.s32.totalorder %s35, %s37
      %p44 = scmp.eq.s32.totalorder %s20, 1
      %p45 = por %p43, %p44
      %p46 = scmp.ne.s32.totalorder %s37, %s38
      %p47 = scmp.eq.s32.totalorder %s20, 0
      %p48 = por %p46, %p47
      %p49 = scmp.ne.s32.totalorder %s37, %s38
      %p50 = scmp.eq.s32.totalorder %s21, 1
      %p51 = por %p49, %p50
      %p53 = scmp.ne.s32.totalorder %s38, %s52
      %p54 = scmp.eq.s32.totalorder %s21, 0
      %p55 = por %p53, %p54
      %s56 = ssub.s32 %s22, %s34
      %s57 = ssub.s32 %s23, %s30
      %s58 = sor.u32 %s56, %s57
      %p59 = scmp.eq.s32.totalorder %s58, 0
      %s61 = sadd.s32 %s60, 1
      %s62 = scalar_select %p59, %s60, %s61
      %p65 = pneg %p59
      %p66 = scmp.eq.s32.totalorder %s15, 1
      %p67 = por %p65, %p66
      %p68 = scmp.ne.s32.totalorder %s60, %s63
      %p69 = scmp.eq.s32.totalorder %s15, 0
      %p70 = por %p68, %p69
      %p71 = scmp.ne.s32.totalorder %s60, %s63
      %p72 = scmp.eq.s32.totalorder %s20, 1
      %p73 = por %p71, %p72
      %p74 = scmp.ne.s32.totalorder %s63, %s64
      %p75 = scmp.eq.s32.totalorder %s20, 0
      %p76 = por %p74, %p75
      %p77 = scmp.ne.s32.totalorder %s63, %s64
      %p78 = scmp.eq.s32.totalorder %s21, 1
      %p79 = por %p77, %p78
      %p81 = scmp.ne.s32.totalorder %s64, %s80
      %p82 = scmp.eq.s32.totalorder %s21, 0
      %p83 = por %p81, %p82
      %s84 = ssub.s32 %s22, %s34
      %s85 = ssub.s32 %s23, %s30
      %s86 = sor.u32 %s84, %s85
      %p87 = scmp.eq.s32.totalorder %s86, 0
      %s89 = sadd.s32 %s88, 1
      %s90 = scalar_select %p87, %s88, %s89
      %p93 = pneg %p87
      %p94 = scmp.eq.s32.totalorder %s15, 1
      %p95 = por %p93, %p94
      %p96 = scmp.ne.s32.totalorder %s88, %s91
      %p97 = scmp.eq.s32.totalorder %s15, 0
      %p98 = por %p96, %p97
      %p99 = scmp.ne.s32.totalorder %s88, %s91
      %p100 = scmp.eq.s32.totalorder %s20, 1
      %p101 = por %p99, %p100
      %p102 = scmp.ne.s32.totalorder %s91, %s92
      %p103 = scmp.eq.s32.totalorder %s20, 0
      %p104 = por %p102, %p103
      %p105 = scmp.ne.s32.totalorder %s91, %s92
      %p106 = scmp.eq.s32.totalorder %s21, 1
      %p107 = por %p105, %p106
      %p109 = scmp.ne.s32.totalorder %s92, %s108
      %p110 = scmp.eq.s32.totalorder %s21, 0
      %p111 = por %p109, %p110
      %p112 = scmp.le.s32.totalorder 1, %s15
      %p113 = scmp.lt.s32.totalorder %s15, 3
      %p114 = pnand %p112, %p113
      %p115 = pneg %p114
      // Predicated region
      $region9: #{tpu_custom_call.1} parent=5 // pred_check
        _
      $region10: #{tpu_custom_call.1} parent=5 // pred_check_branch
        %117 = sbr.rel (%p114) target = $region12
      $region11: #{tpu_custom_call.1} parent=5 // pred_region
        %s118 = ssub.s32 %s15, 1
        // Predicated region
        $region13: #{tpu_custom_call.1} parent=11 // pred_check
          %p119 = pneg %p48
        $region14: #{tpu_custom_call.1} parent=11 // pred_check_branch
          %121 = sbr.rel (%p119) target = $region16
        $region15: #{tpu_custom_call.1} parent=11 // pred_region
          %s123 = ssub.s32 64, 64
          %124 = vsyncadd [#allocation4], %s123
          %s126 = sshll.u32 [#allocation3], 4
          %s127 = int_to_ptr.vmem [resolvable:$true] %s126
          %129 = dma.hbm_to_vmem [thread:$0]  %s0, 64, %s127, [#allocation4]
        $region16: #{tpu_custom_call.1} parent=11 // pred_fallthru
          _
      $region12: #{tpu_custom_call.1} parent=5 // pred_fallthru
        _
      %p130 = scmp.lt.s32.totalorder %s15, 2
      // Predicated region
      $region17: #{tpu_custom_call.1} parent=5 // pred_check
        %p131 = pneg %p130
      $region18: #{tpu_custom_call.1} parent=5 // pred_check_branch
        %133 = sbr.rel (%p131) target = $region20
      $region19: #{tpu_custom_call.1} parent=5 // pred_region
        // Predicated region
        $region21: #{tpu_custom_call.1} parent=19 // pred_check
          %p134 = pneg %p70
        $region22: #{tpu_custom_call.1} parent=19 // pred_check_branch
          %136 = sbr.rel (%p134) target = $region24
        $region23: #{tpu_custom_call.1} parent=19 // pred_region
          %s137 = sand.u32 %s60, 1
          %s138 = scalar_lea.sflag [#allocation7], %s137
          %s139 = sand.u32 %s60, 1
          %s140 = smul.addr %s139, 8
          %s141 = scalar_lea.vmem [#allocation6], %s140
          %s143 = ssub.s32 128, 128
          %144 = vsyncadd %s138, %s143
          %s145 = smul.addr %s23, 2
          %s146 = smul.addr %s22, 2
          %s147 = sadd.s32 %s145, %s146
          %s148 = smul.addr %s147, 64
          %s149 = scalar_lea.hbm %s1, %s148
          %s151 = sshll.u32 %s141, 4
          %s152 = int_to_ptr.vmem [resolvable:$true] %s151
          %154 = dma.hbm_to_vmem [thread:$0]  %s149, 128, %s152, %s138
        $region24: #{tpu_custom_call.1} parent=19 // pred_fallthru
          _
      $region20: #{tpu_custom_call.1} parent=5 // pred_fallthru
        _
      %p155 = scmp.le.s32.totalorder 1, %s15
      %p156 = scmp.lt.s32.totalorder %s15, 3
      %p157 = pnand %p155, %p156
      %p158 = pneg %p157
      // Predicated region
      $region25: #{tpu_custom_call.1} parent=5 // pred_check
        _
      $region26: #{tpu_custom_call.1} parent=5 // pred_check_branch
        %160 = sbr.rel (%p157) target = $region28
      $region27: #{tpu_custom_call.1} parent=5 // pred_region
        %s161 = ssub.s32 %s15, 1
        // Predicated region
        $region29: #{tpu_custom_call.1} parent=27 // pred_check
          %p162 = pneg %p48
        $region30: #{tpu_custom_call.1} parent=27 // pred_check_branch
          %164 = sbr.rel (%p162) target = $region32
        $region31: #{tpu_custom_call.1} parent=27 // pred_region
          %165 = dma.done [#allocation4], 64
        $region32: #{tpu_custom_call.1} parent=27 // pred_fallthru
          _
        %s166 = sand.u32 %s63, 1
        %s167 = scalar_lea.sflag [#allocation7], %s166
        %s168 = sand.u32 %s63, 1
        %s169 = smul.addr %s168, 8
        %s170 = scalar_lea.vmem [#allocation6], %s169
        // Predicated region
        $region33: #{tpu_custom_call.1} parent=27 // pred_check
          %p171 = pneg %p76
        $region34: #{tpu_custom_call.1} parent=27 // pred_check_branch
          %173 = sbr.rel (%p171) target = $region36
        $region35: #{tpu_custom_call.1} parent=27 // pred_region
          %174 = dma.done %s167, 128
        $region36: #{tpu_custom_call.1} parent=27 // pred_fallthru
          _
        %p175 = pneg %p48
        %p176 = pneg %p45
        %s177 = sand.u32 %s63, 1
        %s178 = scalar_lea.sflag [#allocation7], %s177
        %s179 = sand.u32 %s63, 1
        %s180 = smul.addr %s179, 8
        %s181 = scalar_lea.vmem [#allocation6], %s180
        %p182 = pneg %p76
        %p183 = pneg %p73
        %p184 = pneg %p104
        %p185 = pneg %p101
        %s186 = sand.u32 %s91, 1
        %s187 = scalar_lea.sflag [#allocation5], %s186
        %s188 = sand.u32 %s91, 1
        %s189 = smul.addr %s188, 8
        %s190 = scalar_lea.vmem [#allocation8], %s189
        %191 = vst [vmem:[#allocation2] sm:$0xf] 0.0
        %192 = vst [vmem:[#allocation2 + $0xc] sm:$0xf] 0.0
        %v193 = vld [vmem:[%s170] sm:$0xff]
        %194 = vst [vmem:[#allocation2 + $0x4] sm:$0xff] %v193
        %v195 = vld [vmem:[#allocation2] sm:$0xff]
        %v196 = vld [vmem:[#allocation2 + $0x8] sm:$0xf]
        %v197 = vld [vmem:[#allocation2 + $0x4] sm:$0xff]
        %v198 = vld [vmem:[#allocation2 + $0xc] sm:$0xf]
        %201 = vrot.lane.b32.xlu0 %v197, 96
        %v202 = vpop.permute.xlu0 %201
        %203 = vrot.lane.b32.xlu0 %v198, 96
        %v204 = vpop.permute.xlu0 %203
        %v205 = vrot.slane %v202, 4
        %vm206 = vcmask 785408
        %v207 = vsel %vm206, %v205, %v202
        %v208 = vsel %vm206, %v205, %v204
        %v211 = vadd.f32 %v195, %v207
        %v212 = vadd.f32 %v196, %v208
        %v213 = vmul.f32 %v193, 2.0
        %215 = vrot.lane.b32.xlu0 %v213, 112
        %v216 = vpop.permute.xlu0 %215
        %v217 = vrot.slane %v216, 4
        %vm218 = vcmask 916480
        %v219 = vsel %vm218, %v217, %v216
        %v222 = vadd.f32 %v211, %v219
        %v223 = vadd.f32 %v212, %v217
        %v224 = vsub.f32 %v195, %v207
        %v225 = vsub.f32 %v196, %v208
        %v226 = vld [vmem:[#allocation3] ss:$2 sm:$0x3]
        %v228 = vlaneseq
        %v229 = vshrl.u32 %v228, 7
        %v230 = vsub.s32 0, %v229
        %v231 = vrot.slane %v226, %v230
        %v232 = vlaneseq
        %v233 = vshrl.u32 %v232, 7
        %v234 = vsub.s32 1, %v233
        %v235 = vrot.slane %v226, %v234
        %s238 = scalar_lea.vmem [#allocation3], 1
        %v239 = vld [vmem:[%s238] ss:$2 sm:$0x3]
        %v241 = vlaneseq
        %v242 = vshrl.u32 %v241, 7
        %v243 = vsub.s32 0, %v242
        %v244 = vrot.slane %v239, %v243
        %v245 = vlaneseq
        %v246 = vshrl.u32 %v245, 7
        %v247 = vsub.s32 1, %v246
        %v248 = vrot.slane %v239, %v247
        %v253 = vcombine.high %v222, %v222
        %254 = vrot.lane.b32.xlu0 %v222, 16
        %v255 = vpop.permute.xlu0 %254
        %256 = vrot.lane.b32.xlu0 %v253, 16
        %v257 = vpop.permute.xlu0 %256
        %258 = vrot.lane.b32.xlu0 %v223, 16
        %v259 = vpop.permute.xlu0 %258
        %vm260 = vcmask 130048
        %v261 = vsel %vm260, %v255, %v257
        %v262 = vsel %vm260, %v257, %v259
        %265 = vrot.lane.b32.xlu0 %v261, 1
        %v266 = vpop.permute.xlu0 %265
        %267 = vrot.lane.b32.xlu0 %v262, 1
        %v268 = vpop.permute.xlu0 %267
        %v269 = vlaneseq
        %v270 = vand.u32 %v269, 127
        %vm271 = vcmp.lt.s32.totalorder %v270, 1
        %v272 = vsel %vm271, %v266, %v268
        %v273 = vsel %vm271, %v268, %v266
        %v274 = vmul.f32 %v273, %v231
        %v275 = vmul.f32 %v272, %v235
        %276 = vrot.lane.b32.xlu0 %v261, 127
        %v277 = vpop.permute.xlu0 %276
        %278 = vrot.lane.b32.xlu0 %v262, 127
        %v279 = vpop.permute.xlu0 %278
        %vm280 = vcmp.lt.s32.totalorder %v270, 127
        %v281 = vsel %vm280, %v277, %v279
        %v282 = vsel %vm280, %v279, %v277
        %v283 = vmul.f32 %v281, %v244
        %v284 = vmul.f32 %v282, %v248
        %v287 = vcombine.high %v224, %v224
        %288 = vrot.lane.b32.xlu0 %v224, 16
        %v289 = vpop.permute.xlu0 %288
        %290 = vrot.lane.b32.xlu0 %v287, 16
        %v291 = vpop.permute.xlu0 %290
        %292 = vrot.lane.b32.xlu0 %v225, 16
        %v293 = vpop.permute.xlu0 %292
        %v294 = vsel %vm260, %v289, %v291
        %v295 = vsel %vm260, %v291, %v293
        %298 = vrot.lane.b32.xlu0 %v294, 1
        %v299 = vpop.permute.xlu0 %298
        %300 = vrot.lane.b32.xlu0 %v295, 1
        %v301 = vpop.permute.xlu0 %300
        %v302 = vsel %vm271, %v299, %v301
        %v303 = vsel %vm271, %v301, %v299
        %v304 = vmul.f32 %v303, %v231
        %v305 = vmul.f32 %v302, %v235
        %306 = vrot.lane.b32.xlu0 %v294, 127
        %v307 = vpop.permute.xlu0 %306
        %308 = vrot.lane.b32.xlu0 %v295, 127
        %v309 = vpop.permute.xlu0 %308
        %v310 = vsel %vm280, %v307, %v309
        %v311 = vsel %vm280, %v309, %v307
        %v312 = vmul.f32 %v310, %v244
        %v313 = vmul.f32 %v311, %v248
        %v314 = vsub.f32 %v274, %v283
        %v315 = vsub.f32 %v275, %v284
        %v316 = vmul.f32 %v224, 2.0
        %v317 = vmul.f32 %v225, 2.0
        %v320 = vcombine.high %v316, %v316
        %321 = vrot.lane.b32.xlu0 %v316, 16
        %v322 = vpop.permute.xlu0 %321
        %323 = vrot.lane.b32.xlu0 %v320, 16
        %v324 = vpop.permute.xlu0 %323
        %325 = vrot.lane.b32.xlu0 %v317, 16
        %v326 = vpop.permute.xlu0 %325
        %v327 = vsel %vm260, %v322, %v324
        %v328 = vsel %vm260, %v324, %v326
        %v331 = vadd.f32 %v304, %v327
        %v332 = vadd.f32 %v305, %v328
        %v333 = vadd.f32 %v331, %v312
        %v334 = vadd.f32 %v332, %v313
        %v335 = vmul.f32 %v314, %v314
        %v336 = vmul.f32 %v315, %v315
        %v337 = vmul.f32 %v333, %v333
        %v338 = vmul.f32 %v334, %v334
        %v339 = vadd.f32 %v335, %v337
        %v340 = vadd.f32 %v336, %v338
        %v341 = vmax.f32 %v339, 1e-08
        %v342 = vmax.f32 %v340, 1e-08
        %v343 = vrsqrt.pop %v341
        %v344 = vmul.f32 %v341, %v343
        %vm345 = vcmp.eq.f32.partialorder %v341, inf
        %v346 = vsel %vm345, %v341, %v344
        %vm347 = vcmp.eq.f32.partialorder %v341, 0.0
        %v348 = vand.u32 %v341, 2147483648
        %v349 = vsel %vm347, %v348, %v346
        %v350 = vrsqrt.pop %v342
        %v351 = vmul.f32 %v342, %v350
        %vm352 = vcmp.eq.f32.partialorder %v342, inf
        %v353 = vsel %vm352, %v342, %v351
        %vm354 = vcmp.eq.f32.partialorder %v342, 0.0
        %v355 = vand.u32 %v342, 2147483648
        %v356 = vsel %vm354, %v355, %v353
        %v359 = vcombine.low %v349, %v356
        %361 = vst [vmem:[%s190] sm:$0xff] %v359
        %s362 = sand.u32 %s91, 1
        %s363 = scalar_lea.sflag [#allocation5], %s362
        %s364 = sand.u32 %s91, 1
        %s365 = smul.addr %s364, 8
        %s366 = scalar_lea.vmem [#allocation8], %s365
        // Predicated region
        $region37: #{tpu_custom_call.1} parent=27 // pred_check
          %p367 = pneg %p101
        $region38: #{tpu_custom_call.1} parent=27 // pred_check_branch
          %369 = sbr.rel (%p367) target = $region40
        $region39: #{tpu_custom_call.1} parent=27 // pred_region
          %s371 = ssub.s32 128, 128
          %372 = vsyncadd %s363, %s371
          %s373 = smul.addr %s25, 2
          %s374 = smul.addr %s24, 2
          %s375 = sadd.s32 %s373, %s374
          %s376 = smul.addr %s375, 64
          %s377 = scalar_lea.hbm %s2, %s376
          %s379 = sshll.u32 %s366, 4
          %s380 = int_to_ptr.vmem [resolvable:$true] %s379
          %382 = dma.vmem_to_hbm [thread:$0]  %s380, 128, %s377, %s363
        $region40: #{tpu_custom_call.1} parent=27 // pred_fallthru
          _
      $region28: #{tpu_custom_call.1} parent=5 // pred_fallthru
        _
      %p383 = scmp.le.s32.totalorder 2, %s15
      // Predicated region
      $region41: #{tpu_custom_call.1} parent=5 // pred_check
        %p384 = pneg %p383
      $region42: #{tpu_custom_call.1} parent=5 // pred_check_branch
        %386 = sbr.rel (%p384) target = $region44
      $region43: #{tpu_custom_call.1} parent=5 // pred_region
        %s387 = ssub.s32 %s15, 2
        // Predicated region
        $region45: #{tpu_custom_call.1} parent=43 // pred_check
          %p388 = pneg %p107
        $region46: #{tpu_custom_call.1} parent=43 // pred_check_branch
          %390 = sbr.rel (%p388) target = $region48
        $region47: #{tpu_custom_call.1} parent=43 // pred_region
          %s391 = sand.u32 %s92, 1
          %s392 = scalar_lea.sflag [#allocation5], %s391
          %s393 = sand.u32 %s92, 1
          %s394 = smul.addr %s393, 8
          %s395 = scalar_lea.vmem [#allocation8], %s394
          %396 = dma.done %s392, 128
        $region48: #{tpu_custom_call.1} parent=43 // pred_fallthru
          _
      $region44: #{tpu_custom_call.1} parent=5 // pred_fallthru
        _
    $region6: #{tpu_custom_call.1} parent=1 // loop_footer
      %s19 = sadd.s32 1, %s15
    $region7: #{tpu_custom_call.1} parent=1 // loop_footer_branch
      %14 = sbr.rel target = $region3
    $region8: #{tpu_custom_call.1} parent=1 // loop_exit
      _
    %397 = vsyncpa [#allocation4], 1
    %s398 = scalar_lea.sflag [#allocation4], 1
    %399 = vsyncpa %s398, 1
    %400 = vsyncpa [#allocation7], 1
    %s401 = scalar_lea.sflag [#allocation7], 1
    %402 = vsyncpa %s401, 1
    %403 = vsyncpa [#allocation5], 1
    %s404 = scalar_lea.sflag [#allocation5], 1
    %405 = vsyncpa %s404, 1

</llo_original>
